<compile_context>
chip_gen: v5e
topology: v5e:2x2
jax: 0.10.0
libtpu: 0.0.40
codegen_flags: <defaults>
</compile_context>

<pallas_src>
import functools
import math

import jax
import jax.numpy as jnp
from jax.experimental import pallas as pl
from jax.experimental.pallas import tpu as pltpu

LN_EPS = 1e-5
_VMEM_LIMIT = 64 * 1024 * 1024   # explicit budget; fits v7x's 64 MiB and v5e/v6e's 128 MiB


def _pick_tile(n, cap):
    """Largest tile <= cap that divides n and keeps the second-minor block dim 8-aligned;
    falls back to the full extent (always a legal block shape)."""
    if n <= cap:
        return n
    for t in range(cap - cap % 8, 7, -8):
        if n % t == 0:
            return t
    return n


# ----------------------------------------------------------------------------
# Shared attention + residual + LayerNorm core (runs on one (batch, q-tile) step).
# ----------------------------------------------------------------------------
def _attn_core(x_tile, kv_src, wq, wkv, wo, gamma, beta, o_ref, *, nhead, d_qkv, eps):
    f32 = jnp.float32
    act_dt = x_tile.dtype
    hd = nhead * d_qkv

    # Lane-dense fused projections: Q once for the query tile, K|V in ONE matmul.
    q = jnp.dot(x_tile, wq, preferred_element_type=f32).astype(act_dt)    # (TQ, H*DQ), scale folded
    kv = jnp.dot(kv_src, wkv, preferred_element_type=f32).astype(act_dt)  # (S, 2*H*DQ)

    dn = (((1,), (1,)), ((), ()))   # contract last dims: q @ k^T without materializing k.T
    heads = []
    for h in range(nhead):          # static unroll, H is small
        qh = q[:, h * d_qkv:(h + 1) * d_qkv]
        kh = kv[:, h * d_qkv:(h + 1) * d_qkv]
        vh = kv[:, hd + h * d_qkv: hd + (h + 1) * d_qkv]
        logits = jax.lax.dot_general(qh, kh, dn, preferred_element_type=f32)   # (TQ, S) f32
        m = jnp.max(logits, axis=-1, keepdims=True)
        e = jnp.exp(logits - m)
        p = e * pl.reciprocal(jnp.sum(e, axis=-1, keepdims=True), approx=False)
        heads.append(jnp.dot(p.astype(act_dt), vh,
                             preferred_element_type=f32).astype(act_dt))       # (TQ, DQ)

    # Single (TQ, H*DQ) @ (H*DQ, D) output projection instead of per-head accumulation.
    attn = jnp.dot(jnp.concatenate(heads, axis=-1), wo, preferred_element_type=f32)  # (TQ, D)

    # Fused residual add + post-LayerNorm (f32 math regardless of activation dtype).
    y = x_tile.astype(f32) + attn
    mu = jnp.mean(y, axis=-1, keepdims=True)
    var = jnp.mean(jnp.square(y - mu), axis=-1, keepdims=True)
    yn = (y - mu) * jax.lax.rsqrt(var + eps)
    o_ref[0] = (yn * gamma + beta).astype(o_ref.dtype)


def _self_attn_block_kernel(x_ref, wq_ref, wkv_ref, wo_ref, g_ref, b_ref, o_ref,
                            *, q_tile, nhead, d_qkv, eps):
    # x_ref holds the full sequence for this batch element (DMA'd once, constant block
    # index across the q-tile axis). Reuse it as Q source, K/V source, and residual.
    qi = pl.program_id(1)
    start = pl.multiple_of(qi * q_tile, q_tile)
    x_tile = x_ref[0, pl.ds(start, q_tile), :]   # (TQ, D): queries + residual
    kv_src = x_ref[0]                            # (T, D):  keys/values source (same ref)
    _attn_core(x_tile, kv_src, wq_ref[...], wkv_ref[...], wo_ref[...],
               g_ref[...], b_ref[...], o_ref, nhead=nhead, d_qkv=d_qkv, eps=eps)


def _cross_attn_block_kernel(x_ref, mem_ref, wq_ref, wkv_ref, wo_ref, g_ref, b_ref, o_ref,
                             *, nhead, d_qkv, eps):
    _attn_core(x_ref[0], mem_ref[0], wq_ref[...], wkv_ref[...], wo_ref[...],
               g_ref[...], b_ref[...], o_ref, nhead=nhead, d_qkv=d_qkv, eps=eps)


def _fuse_attn_weights(p, dtype):
    """Fold per-head (H, D, DQ) projections into lane-dense (D, H*DQ) matrices.
    The 1/sqrt(DQ) logit scale is folded into w_q; K and V are fused into one matrix."""
    H, D, DQ = p["w_q"].shape
    scale = 1.0 / math.sqrt(DQ)
    wq = (jnp.transpose(p["w_q"], (1, 0, 2)).reshape(D, H * DQ) * scale).astype(dtype)
    wk = jnp.transpose(p["w_k"], (1, 0, 2)).reshape(D, H * DQ)
    wv = jnp.transpose(p["w_v"], (1, 0, 2)).reshape(D, H * DQ)
    wkv = jnp.concatenate([wk, wv], axis=-1).astype(dtype)      # (D, 2*H*DQ)
    wo = p["w_o"].reshape(H * DQ, D).astype(dtype)              # (H*DQ, D)
    return wq, wkv, wo


def attn_add_norm(x_b, mem_b, p_attn, p_norm, *, q_tile_cap=256):
    """Fused MHA (self if mem_b is None, else cross) + residual add + LayerNorm.
    x_b: (B, T, D) batch-first activations; mem_b: (B, S, D) or None."""
    B, T, D = x_b.shape
    dt = x_b.dtype
    H, _, DQ = p_attn["w_q"].shape
    hd = H * DQ

    wq, wkv, wo = _fuse_attn_weights(p_attn, dt)
    gamma = p_norm["g"].reshape(1, D).astype(jnp.float32)
    beta = p_norm["b"].reshape(1, D).astype(jnp.float32)

    tq = _pick_tile(T, q_tile_cap)
    nq = T // tq
    S = T if mem_b is None else mem_b.shape[1]

    isz = jnp.dtype(dt).itemsize
    flops = 2 * B * (T * D * hd + S * D * 2 * hd + 2 * H * T * S * DQ + T * hd * D)
    cost = pl.CostEstimate(
        flops=int(flops),
        transcendentals=int(B * H * T * S),
        bytes_accessed=int(isz * (2 * B * T * D + (0 if mem_b is None else B * S * D)
                                  + 3 * D * hd + hd * D) + 4 * 2 * D))

    w_specs = [
        pl.BlockSpec((D, hd), lambda b, q: (0, 0)),
        pl.BlockSpec((D, 2 * hd), lambda b, q: (0, 0)),
        pl.BlockSpec((hd, D), lambda b, q: (0, 0)),
        pl.BlockSpec((1, D), lambda b, q: (0, 0)),
        pl.BlockSpec((1, D), lambda b, q: (0, 0)),
    ]
    out_spec = pl.BlockSpec((1, tq, D), lambda b, q: (b, q, 0))

    if mem_b is None:
        kernel = functools.partial(_self_attn_block_kernel, q_tile=tq,
                                   nhead=H, d_qkv=DQ, eps=LN_EPS)
        in_specs = [pl.BlockSpec((1, T, D), lambda b, q: (b, 0, 0))] + w_specs
        args = (x_b, wq, wkv, wo, gamma, beta)
    else:
        kernel = functools.partial(_cross_attn_block_kernel,
                                   nhead=H, d_qkv=DQ, eps=LN_EPS)
        in_specs = [pl.BlockSpec((1, tq, D), lambda b, q: (b, q, 0)),
                    pl.BlockSpec((1, S, D), lambda b, q: (b, 0, 0))] + w_specs
        args = (x_b, mem_b, wq, wkv, wo, gamma, beta)

    return pl.pallas_call(
        kernel,
        out_shape=jax.ShapeDtypeStruct((B, T, D), dt),
        grid_spec=pltpu.PrefetchScalarGridSpec(
            num_scalar_prefetch=0,
            grid=(B, nq),
            in_specs=in_specs,
            out_specs=out_spec),
        compiler_params=pltpu.CompilerParams(
            dimension_semantics=("parallel", "parallel"),
            vmem_limit_bytes=_VMEM_LIMIT),
        cost_estimate=cost,
    )(*args)


# ----------------------------------------------------------------------------
# Row-tiled FFN with fused residual add + LayerNorm.
# ----------------------------------------------------------------------------
def _ffn_norm_kernel(x_ref, w1_ref, b1_ref, w2_ref, b2_ref, g_ref, bn_ref, o_ref, *, eps):
    f32 = jnp.float32
    x = x_ref[...]                                                     # (TM, D)
    h = jnp.dot(x, w1_ref[...], preferred_element_type=f32) + b1_ref[...].astype(f32)
    h = jnp.maximum(h, 0.0)
    ff = jnp.dot(h.astype(w2_ref.dtype), w2_ref[...],
                 preferred_element_type=f32) + b2_ref[...].astype(f32)
    y = x.astype(f32) + ff                                             # fused residual
    mu = jnp.mean(y, axis=-1, keepdims=True)
    var = jnp.mean(jnp.square(y - mu), axis=-1, keepdims=True)
    yn = (y - mu) * jax.lax.rsqrt(var + eps)
    o_ref[...] = (yn * g_ref[...] + bn_ref[...]).astype(o_ref.dtype)


def ffn_add_norm(x_b, p_ffn, p_norm, *, row_tile_cap=512):
    B, T, D = x_b.shape
    dt = x_b.dtype
    Dff = p_ffn["w1"].shape[1]
    N = B * T
    x2 = x_b.reshape(N, D)
    tm = _pick_tile(N, row_tile_cap)

    w1 = p_ffn["w1"].astype(dt)
    w2 = p_ffn["w2"].astype(dt)
    b1 = p_ffn["b1"].reshape(1, Dff).astype(dt)
    b2 = p_ffn["b2"].reshape(1, D).astype(dt)
    gamma = p_norm["g"].reshape(1, D).astype(jnp.float32)
    beta = p_norm["b"].reshape(1, D).astype(jnp.float32)

    isz = jnp.dtype(dt).itemsize
    cost = pl.CostEstimate(
        flops=int(4 * N * D * Dff + 10 * N * D),
        transcendentals=0,
        bytes_accessed=int(isz * (2 * N * D + 2 * D * Dff + Dff + D) + 4 * 2 * D))

    out = pl.pallas_call(
        functools.partial(_ffn_norm_kernel, eps=LN_EPS),
        out_shape=jax.ShapeDtypeStruct((N, D), dt),
        grid_spec=pltpu.PrefetchScalarGridSpec(
            num_scalar_prefetch=0,
            grid=(N // tm,),
            in_specs=[
                pl.BlockSpec((tm, D), lambda i: (i, 0)),
                pl.BlockSpec((D, Dff), lambda i: (0, 0)),
                pl.BlockSpec((1, Dff), lambda i: (0, 0)),
                pl.BlockSpec((Dff, D), lambda i: (0, 0)),
                pl.BlockSpec((1, D), lambda i: (0, 0)),
                pl.BlockSpec((1, D), lambda i: (0, 0)),
                pl.BlockSpec((1, D), lambda i: (0, 0)),
            ],
            out_specs=pl.BlockSpec((tm, D), lambda i: (i, 0))),
        compiler_params=pltpu.CompilerParams(
            dimension_semantics=("parallel",),
            vmem_limit_bytes=_VMEM_LIMIT),
        cost_estimate=cost,
    )(x2, w1, b1, w2, b2, gamma, beta)
    return out.reshape(B, T, D)


# ----------------------------------------------------------------------------
# Full decoder layer.
# ----------------------------------------------------------------------------
def transformer_decoder_layer(tgt, memory, params, *, compute_dtype=None):
    """tgt: (T, B, D), memory: (S, B, D) -> (T, B, D).
    compute_dtype=jnp.bfloat16 enables the bf16 MXU fast path (v6e/v7x); accumulation,
    softmax and LayerNorm math stay in f32 inside the kernels."""
    # TODO(synk): tgt_mask / key-padding masks are not supported (default-None path only).
    dt = tgt.dtype if compute_dtype is None else compute_dtype

    # One layout change each way; the batch-first slabs are reused by all three sublayers.
    x = jnp.transpose(tgt, (1, 0, 2)).astype(dt)       # (B, T, D)
    mem = jnp.transpose(memory, (1, 0, 2)).astype(dt)  # (B, S, D)

    x = attn_add_norm(x, None, params["self_attn"], params["norm1"])       # self-attn + LN1
    x = attn_add_norm(x, mem, params["multihead_attn"], params["norm2"])   # cross-attn + LN2
    x = ffn_add_norm(x, params["ffn"], params["norm3"])                    # FFN + LN3

    return jnp.transpose(x, (1, 0, 2)).astype(tgt.dtype)                   # back to (T, B, D)


# ----------------------------------------------------------------------------
# Deterministic parameter initialization (shapes from the PyTorch __init__).
# ----------------------------------------------------------------------------
def init_params(key, d_model, nhead, dim_feedforward):
    dq = d_model // nhead
    keys = jax.random.split(key, 12)

    def xav(k, shape, fan_in, fan_out):
        std = math.sqrt(2.0 / (fan_in + fan_out))
        return std * jax.random.normal(k, shape, dtype=jnp.float32)

    def attn_params(k0, k1, k2, k3):
        return {
            "w_q": xav(k0, (nhead, d_model, dq), d_model, dq),
            "w_k": xav(k1, (nhead, d_model, dq), d_model, dq),
            "w_v": xav(k2, (nhead, d_model, dq), d_model, dq),
            "w_o": xav(k3, (nhead, dq, d_model), dq, d_model),
        }

    return {
        "self_attn": attn_params(*keys[0:4]),
        "multihead_attn": attn_params(*keys[4:8]),
        "ffn": {
            "w1": (1.0 / math.sqrt(d_model))
                  * jax.random.normal(keys[8], (d_model, dim_feedforward), dtype=jnp.float32),
            "b1": (1.0 / math.sqrt(d_model))
                  * jax.random.normal(keys[9], (dim_feedforward,), dtype=jnp.float32),
            "w2": (1.0 / math.sqrt(dim_feedforward))
                  * jax.random.normal(keys[10], (dim_feedforward, d_model), dtype=jnp.float32),
            "b2": (1.0 / math.sqrt(dim_feedforward))
                  * jax.random.normal(keys[11], (d_model,), dtype=jnp.float32),
        },
        "norm1": {"g": jnp.ones((d_model,), jnp.float32), "b": jnp.zeros((d_model,), jnp.float32)},
        "norm2": {"g": jnp.ones((d_model,), jnp.float32), "b": jnp.zeros((d_model,), jnp.float32)},
        "norm3": {"g": jnp.ones((d_model,), jnp.float32), "b": jnp.zeros((d_model,), jnp.float32)},
    }


# ----------------------------------------------------------------------------
# Pure-JAX reference (mirrors the PyTorch einsum math) for a correctness check.
# ----------------------------------------------------------------------------
def _mha_ref(q, k, v, p):
    dq = p["w_q"].shape[-1]
    qh = jnp.einsum("tbf,hfa->bhta", q, p["w_q"])
    kh = jnp.einsum("tbf,hfa->bhta", k, p["w_k"])
    vh = jnp.einsum("tbf,hfa->bhta", v, p["w_v"])
    logits = jnp.einsum("bhqa,bhka->bhqk", qh, kh) / math.sqrt(dq)
    probs = jax.nn.softmax(logits, axis=-1)
    o = jnp.einsum("bhqk,bhka->bhqa", probs, vh)
    return jnp.einsum("bhta,haf->tbf", o, p["w_o"])


def _layer_ref(tgt, memory, params):
    def ln(x, g, b):
        m = x.mean(-1, keepdims=True)
        v = ((x - m) ** 2).mean(-1, keepdims=True)
        return (x - m) / jnp.sqrt(v + LN_EPS) * g + b

    t2 = _mha_ref(tgt, tgt, tgt, params["self_attn"])
    x = ln(tgt + t2, params["norm1"]["g"], params["norm1"]["b"])
    t2 = _mha_ref(x, memory, memory, params["multihead_attn"])
    x = ln(x + t2, params["norm2"]["g"], params["norm2"]["b"])
    fp = params["ffn"]
    t2 = jnp.maximum(x @ fp["w1"] + fp["b1"], 0.0) @ fp["w2"] + fp["b2"]
    x = ln(x + t2, params["norm3"]["g"], params["norm3"]["b"])
    return x


if __name__ == "__main__":
    T, S, B = 8, 12, 2          # tgt length, memory length, batch
    d_model, nhead, dff = 32, 4, 64

    key = jax.random.PRNGKey(0)
    kp, kt, km = jax.random.split(key, 3)
    params = init_params(kp, d_model, nhead, dff)
    tgt = jax.random.normal(kt, (T, B, d_model), dtype=jnp.float32)
    memory = jax.random.normal(km, (S, B, d_model), dtype=jnp.float32)

    ref = _layer_ref(tgt, memory, params)

    # f32 path: tight correctness check against the reference.
    out = jax.block_until_ready(transformer_decoder_layer(tgt, memory, params))
    assert out.shape == (T, B, d_model)
    assert jnp.allclose(out, ref, atol=1e-4, rtol=1e-4), "f32 mismatch vs reference"

    # bf16 fast path (v6e/v7x MXU): bf16 matmul inputs, f32 accumulation + f32 softmax/LN.
    out_bf16 = jax.block_until_ready(
        transformer_decoder_layer(tgt, memory, params, compute_dtype=jnp.bfloat16))
    assert out_bf16.shape == (T, B, d_model)
    out_bf16_f32 = out_bf16.astype(jnp.float32)
    assert bool(jnp.all(jnp.isfinite(out_bf16_f32)))
    assert jnp.allclose(out_bf16_f32, ref, atol=0.25, rtol=0.25), "bf16 mismatch vs reference"

    print("KERNEL_OK")
</pallas_src>

<mosaic_0001>
module attributes {stable_mosaic.version = 11 : i64} {
  func.func @_self_attn_block_kernel(%arg0: i32, %arg1: i32, %arg2: memref<1x8x32xf32, #tpu.memory_space<vmem>>, %arg3: memref<32x32xf32, #tpu.memory_space<vmem>>, %arg4: memref<32x64xf32, #tpu.memory_space<vmem>>, %arg5: memref<32x32xf32, #tpu.memory_space<vmem>>, %arg6: memref<1x32xf32, #tpu.memory_space<vmem>>, %arg7: memref<1x32xf32, #tpu.memory_space<vmem>>, %arg8: memref<1x8x32xf32, #tpu.memory_space<vmem>>) attributes {dimension_semantics = [#tpu.dimension_semantics<parallel>, #tpu.dimension_semantics<parallel>], iteration_bounds = array<i64: 2, 1>, scalar_prefetch = 0 : i64, scratch_operands = 0 : i64, tpu.core_type = #tpu.core_type<tc>, window_params = [{transform_indices = @transform_0, window_bounds = array<i64: 1, 8, 32>}, {pipeline_mode = #tpu.pipeline_mode<synchronous>, transform_indices = @transform_1, window_bounds = array<i64: 32, 32>}, {pipeline_mode = #tpu.pipeline_mode<synchronous>, transform_indices = @transform_2, window_bounds = array<i64: 32, 64>}, {pipeline_mode = #tpu.pipeline_mode<synchronous>, transform_indices = @transform_3, window_bounds = array<i64: 32, 32>}, {pipeline_mode = #tpu.pipeline_mode<synchronous>, transform_indices = @transform_4, window_bounds = array<i64: 1, 32>}, {pipeline_mode = #tpu.pipeline_mode<synchronous>, transform_indices = @transform_5, window_bounds = array<i64: 1, 32>}, {transform_indices = @transform_6, window_bounds = array<i64: 1, 8, 32>}]} {
    %c8_i32 = arith.constant 8 : i32
    %0 = arith.muli %arg1, %c8_i32 : i32
    %1 = tpu.assume_multiple %0, 8 : i32
    %c0 = arith.constant 0 : index
    %2 = arith.index_cast %1 : i32 to index
    %c0_0 = arith.constant 0 : index
    %3 = vector.load %arg2[%c0, %2, %c0_0] : memref<1x8x32xf32, #tpu.memory_space<vmem>>, vector<1x8x32xf32>
    %4 = vector.shape_cast %3 : vector<1x8x32xf32> to vector<8x32xf32>
    %c0_1 = arith.constant 0 : index
    %c0_2 = arith.constant 0 : index
    %c0_3 = arith.constant 0 : index
    %5 = vector.load %arg2[%c0_1, %c0_2, %c0_3] : memref<1x8x32xf32, #tpu.memory_space<vmem>>, vector<1x8x32xf32>
    %6 = vector.shape_cast %5 : vector<1x8x32xf32> to vector<8x32xf32>
    %c0_4 = arith.constant 0 : index
    %c0_5 = arith.constant 0 : index
    %7 = vector.load %arg3[%c0_4, %c0_5] : memref<32x32xf32, #tpu.memory_space<vmem>>, vector<32x32xf32>
    %c0_6 = arith.constant 0 : index
    %c0_7 = arith.constant 0 : index
    %8 = vector.load %arg4[%c0_6, %c0_7] : memref<32x64xf32, #tpu.memory_space<vmem>>, vector<32x64xf32>
    %c0_8 = arith.constant 0 : index
    %c0_9 = arith.constant 0 : index
    %9 = vector.load %arg5[%c0_8, %c0_9] : memref<32x32xf32, #tpu.memory_space<vmem>>, vector<32x32xf32>
    %c0_10 = arith.constant 0 : index
    %c0_11 = arith.constant 0 : index
    %10 = vector.load %arg6[%c0_10, %c0_11] : memref<1x32xf32, #tpu.memory_space<vmem>>, vector<1x32xf32>
    %c0_12 = arith.constant 0 : index
    %c0_13 = arith.constant 0 : index
    %11 = vector.load %arg7[%c0_12, %c0_13] : memref<1x32xf32, #tpu.memory_space<vmem>>, vector<1x32xf32>
    %cst = arith.constant dense<0.000000e+00> : vector<8x32xf32>
    %12 = tpu.matmul %4, %7, %cst {dimension_numbers = #tpu.dot_dimension_numbers<[1], [0], [0], [1], [0, 0, 1, 1], [], []>} : vector<8x32xf32>, vector<32x32xf32>, vector<8x32xf32> -> vector<8x32xf32>
    %cst_14 = arith.constant dense<0.000000e+00> : vector<8x64xf32>
    %13 = tpu.matmul %6, %8, %cst_14 {dimension_numbers = #tpu.dot_dimension_numbers<[1], [0], [0], [1], [0, 0, 1, 1], [], []>} : vector<8x32xf32>, vector<32x64xf32>, vector<8x64xf32> -> vector<8x64xf32>
    %14 = vector.extract_strided_slice %12 {offsets = [0, 0], sizes = [8, 8], strides = [1, 1]} : vector<8x32xf32> to vector<8x8xf32>
    %15 = vector.extract_strided_slice %13 {offsets = [0, 0], sizes = [8, 8], strides = [1, 1]} : vector<8x64xf32> to vector<8x8xf32>
    %16 = vector.extract_strided_slice %13 {offsets = [0, 32], sizes = [8, 8], strides = [1, 1]} : vector<8x64xf32> to vector<8x8xf32>
    %cst_15 = arith.constant dense<0.000000e+00> : vector<8x8xf32>
    %17 = tpu.matmul %14, %15, %cst_15 {dimension_numbers = #tpu.dot_dimension_numbers<[1], [1], [0], [0], [0, 0, 1, 0], [], []>} : vector<8x8xf32>, vector<8x8xf32>, vector<8x8xf32> -> vector<8x8xf32>
    %cst_16 = arith.constant dense<0xFF800000> : vector<8xf32>
    %18 = vector.multi_reduction <maximumf>, %17, %cst_16 [1] : vector<8x8xf32> to vector<8xf32>
    %19 = vector.shape_cast %18 : vector<8xf32> to vector<8x1xf32>
    %20 = vector.broadcast %19 : vector<8x1xf32> to vector<8x8xf32>
    %21 = arith.subf %17, %20 : vector<8x8xf32>
    %22 = math.exp %21 : vector<8x8xf32>
    %cst_17 = arith.constant dense<0.000000e+00> : vector<8xf32>
    %23 = vector.multi_reduction <add>, %22, %cst_17 [1] : vector<8x8xf32> to vector<8xf32>
    %24 = vector.shape_cast %23 : vector<8xf32> to vector<8x1xf32>
    %25 = tpu.reciprocal %24 : vector<8x1xf32> -> vector<8x1xf32>
    %26 = vector.broadcast %25 : vector<8x1xf32> to vector<8x8xf32>
    %27 = arith.mulf %22, %26 : vector<8x8xf32>
    %cst_18 = arith.constant dense<0.000000e+00> : vector<8x8xf32>
    %28 = tpu.matmul %27, %16, %cst_18 {dimension_numbers = #tpu.dot_dimension_numbers<[1], [0], [0], [1], [0, 0, 1, 1], [], []>} : vector<8x8xf32>, vector<8x8xf32>, vector<8x8xf32> -> vector<8x8xf32>
    %29 = vector.extract_strided_slice %12 {offsets = [0, 8], sizes = [8, 8], strides = [1, 1]} : vector<8x32xf32> to vector<8x8xf32>
    %30 = vector.extract_strided_slice %13 {offsets = [0, 8], sizes = [8, 8], strides = [1, 1]} : vector<8x64xf32> to vector<8x8xf32>
    %31 = vector.extract_strided_slice %13 {offsets = [0, 40], sizes = [8, 8], strides = [1, 1]} : vector<8x64xf32> to vector<8x8xf32>
    %cst_19 = arith.constant dense<0.000000e+00> : vector<8x8xf32>
    %32 = tpu.matmul %29, %30, %cst_19 {dimension_numbers = #tpu.dot_dimension_numbers<[1], [1], [0], [0], [0, 0, 1, 0], [], []>} : vector<8x8xf32>, vector<8x8xf32>, vector<8x8xf32> -> vector<8x8xf32>
    %cst_20 = arith.constant dense<0xFF800000> : vector<8xf32>
    %33 = vector.multi_reduction <maximumf>, %32, %cst_20 [1] : vector<8x8xf32> to vector<8xf32>
    %34 = vector.shape_cast %33 : vector<8xf32> to vector<8x1xf32>
    %35 = vector.broadcast %34 : vector<8x1xf32> to vector<8x8xf32>
    %36 = arith.subf %32, %35 : vector<8x8xf32>
    %37 = math.exp %36 : vector<8x8xf32>
    %cst_21 = arith.constant dense<0.000000e+00> : vector<8xf32>
    %38 = vector.multi_reduction <add>, %37, %cst_21 [1] : vector<8x8xf32> to vector<8xf32>
    %39 = vector.shape_cast %38 : vector<8xf32> to vector<8x1xf32>
    %40 = tpu.reciprocal %39 : vector<8x1xf32> -> vector<8x1xf32>
    %41 = vector.broadcast %40 : vector<8x1xf32> to vector<8x8xf32>
    %42 = arith.mulf %37, %41 : vector<8x8xf32>
    %cst_22 = arith.constant dense<0.000000e+00> : vector<8x8xf32>
    %43 = tpu.matmul %42, %31, %cst_22 {dimension_numbers = #tpu.dot_dimension_numbers<[1], [0], [0], [1], [0, 0, 1, 1], [], []>} : vector<8x8xf32>, vector<8x8xf32>, vector<8x8xf32> -> vector<8x8xf32>
    %44 = vector.extract_strided_slice %12 {offsets = [0, 16], sizes = [8, 8], strides = [1, 1]} : vector<8x32xf32> to vector<8x8xf32>
    %45 = vector.extract_strided_slice %13 {offsets = [0, 16], sizes = [8, 8], strides = [1, 1]} : vector<8x64xf32> to vector<8x8xf32>
    %46 = vector.extract_strided_slice %13 {offsets = [0, 48], sizes = [8, 8], strides = [1, 1]} : vector<8x64xf32> to vector<8x8xf32>
    %cst_23 = arith.constant dense<0.000000e+00> : vector<8x8xf32>
    %47 = tpu.matmul %44, %45, %cst_23 {dimension_numbers = #tpu.dot_dimension_numbers<[1], [1], [0], [0], [0, 0, 1, 0], [], []>} : vector<8x8xf32>, vector<8x8xf32>, vector<8x8xf32> -> vector<8x8xf32>
    %cst_24 = arith.constant dense<0xFF800000> : vector<8xf32>
    %48 = vector.multi_reduction <maximumf>, %47, %cst_24 [1] : vector<8x8xf32> to vector<8xf32>
    %49 = vector.shape_cast %48 : vector<8xf32> to vector<8x1xf32>
    %50 = vector.broadcast %49 : vector<8x1xf32> to vector<8x8xf32>
    %51 = arith.subf %47, %50 : vector<8x8xf32>
    %52 = math.exp %51 : vector<8x8xf32>
    %cst_25 = arith.constant dense<0.000000e+00> : vector<8xf32>
    %53 = vector.multi_reduction <add>, %52, %cst_25 [1] : vector<8x8xf32> to vector<8xf32>
    %54 = vector.shape_cast %53 : vector<8xf32> to vector<8x1xf32>
    %55 = tpu.reciprocal %54 : vector<8x1xf32> -> vector<8x1xf32>
    %56 = vector.broadcast %55 : vector<8x1xf32> to vector<8x8xf32>
    %57 = arith.mulf %52, %56 : vector<8x8xf32>
    %cst_26 = arith.constant dense<0.000000e+00> : vector<8x8xf32>
    %58 = tpu.matmul %57, %46, %cst_26 {dimension_numbers = #tpu.dot_dimension_numbers<[1], [0], [0], [1], [0, 0, 1, 1], [], []>} : vector<8x8xf32>, vector<8x8xf32>, vector<8x8xf32> -> vector<8x8xf32>
    %59 = vector.extract_strided_slice %12 {offsets = [0, 24], sizes = [8, 8], strides = [1, 1]} : vector<8x32xf32> to vector<8x8xf32>
    %60 = vector.extract_strided_slice %13 {offsets = [0, 24], sizes = [8, 8], strides = [1, 1]} : vector<8x64xf32> to vector<8x8xf32>
    %61 = vector.extract_strided_slice %13 {offsets = [0, 56], sizes = [8, 8], strides = [1, 1]} : vector<8x64xf32> to vector<8x8xf32>
    %cst_27 = arith.constant dense<0.000000e+00> : vector<8x8xf32>
    %62 = tpu.matmul %59, %60, %cst_27 {dimension_numbers = #tpu.dot_dimension_numbers<[1], [1], [0], [0], [0, 0, 1, 0], [], []>} : vector<8x8xf32>, vector<8x8xf32>, vector<8x8xf32> -> vector<8x8xf32>
    %cst_28 = arith.constant dense<0xFF800000> : vector<8xf32>
    %63 = vector.multi_reduction <maximumf>, %62, %cst_28 [1] : vector<8x8xf32> to vector<8xf32>
    %64 = vector.shape_cast %63 : vector<8xf32> to vector<8x1xf32>
    %65 = vector.broadcast %64 : vector<8x1xf32> to vector<8x8xf32>
    %66 = arith.subf %62, %65 : vector<8x8xf32>
    %67 = math.exp %66 : vector<8x8xf32>
    %cst_29 = arith.constant dense<0.000000e+00> : vector<8xf32>
    %68 = vector.multi_reduction <add>, %67, %cst_29 [1] : vector<8x8xf32> to vector<8xf32>
    %69 = vector.shape_cast %68 : vector<8xf32> to vector<8x1xf32>
    %70 = tpu.reciprocal %69 : vector<8x1xf32> -> vector<8x1xf32>
    %71 = vector.broadcast %70 : vector<8x1xf32> to vector<8x8xf32>
    %72 = arith.mulf %67, %71 : vector<8x8xf32>
    %cst_30 = arith.constant dense<0.000000e+00> : vector<8x8xf32>
    %73 = tpu.matmul %72, %61, %cst_30 {dimension_numbers = #tpu.dot_dimension_numbers<[1], [0], [0], [1], [0, 0, 1, 1], [], []>} : vector<8x8xf32>, vector<8x8xf32>, vector<8x8xf32> -> vector<8x8xf32>
    %74 = tpu.concatenate %28, %43, %58, %73 in 1 : vector<8x8xf32>, vector<8x8xf32>, vector<8x8xf32>, vector<8x8xf32> -> vector<8x32xf32>
    %cst_31 = arith.constant dense<0.000000e+00> : vector<8x32xf32>
    %75 = tpu.matmul %74, %9, %cst_31 {dimension_numbers = #tpu.dot_dimension_numbers<[1], [0], [0], [1], [0, 0, 1, 1], [], []>} : vector<8x32xf32>, vector<32x32xf32>, vector<8x32xf32> -> vector<8x32xf32>
    %76 = arith.addf %4, %75 : vector<8x32xf32>
    %cst_32 = arith.constant dense<0.000000e+00> : vector<8xf32>
    %77 = vector.multi_reduction <add>, %76, %cst_32 [1] : vector<8x32xf32> to vector<8xf32>
    %78 = vector.shape_cast %77 : vector<8xf32> to vector<8x1xf32>
    %cst_33 = arith.constant 3.200000e+01 : f32
    %79 = vector.broadcast %cst_33 : f32 to vector<8x1xf32>
    %80 = arith.divf %78, %79 : vector<8x1xf32>
    %81 = vector.broadcast %80 : vector<8x1xf32> to vector<8x32xf32>
    %82 = arith.subf %76, %81 : vector<8x32xf32>
    %83 = arith.mulf %82, %82 : vector<8x32xf32>
    %cst_34 = arith.constant dense<0.000000e+00> : vector<8xf32>
    %84 = vector.multi_reduction <add>, %83, %cst_34 [1] : vector<8x32xf32> to vector<8xf32>
    %85 = vector.shape_cast %84 : vector<8xf32> to vector<8x1xf32>
    %cst_35 = arith.constant 3.200000e+01 : f32
    %86 = vector.broadcast %cst_35 : f32 to vector<8x1xf32>
    %87 = arith.divf %85, %86 : vector<8x1xf32>
    %88 = vector.broadcast %80 : vector<8x1xf32> to vector<8x32xf32>
    %89 = arith.subf %76, %88 : vector<8x32xf32>
    %cst_36 = arith.constant 9.99999974E-6 : f32
    %90 = vector.broadcast %cst_36 : f32 to vector<8x1xf32>
    %91 = arith.addf %87, %90 : vector<8x1xf32>
    %92 = math.rsqrt %91 : vector<8x1xf32>
    %93 = vector.broadcast %92 : vector<8x1xf32> to vector<8x32xf32>
    %94 = arith.mulf %89, %93 : vector<8x32xf32>
    %95 = vector.broadcast %10 : vector<1x32xf32> to vector<8x32xf32>
    %96 = arith.mulf %94, %95 : vector<8x32xf32>
    %97 = vector.broadcast %11 : vector<1x32xf32> to vector<8x32xf32>
    %98 = arith.addf %96, %97 : vector<8x32xf32>
    %c0_37 = arith.constant 0 : index
    %c0_38 = arith.constant 0 : index
    %c0_39 = arith.constant 0 : index
    %99 = vector.load %arg8[%c0_37, %c0_38, %c0_39] : memref<1x8x32xf32, #tpu.memory_space<vmem>>, vector<1x8x32xf32>
    %100 = vector.shape_cast %99 : vector<1x8x32xf32> to vector<8x32xf32>
    %101 = vector.shape_cast %98 : vector<8x32xf32> to vector<1x8x32xf32>
    tpu.vector_store %arg8[%c0_37, %c0_38, %c0_39], %101 {strides = array<i32>} : memref<1x8x32xf32, #tpu.memory_space<vmem>>, vector<1x8x32xf32>,
    return
  }
  func.func @transform_0(%arg0: i32, %arg1: i32) -> (i32, i32, i32) {
    %c0_i32 = arith.constant 0 : i32
    %c0_i32_0 = arith.constant 0 : i32
    %c0_i32_1 = arith.constant 0 : i32
    return %arg0, %c0_i32, %c0_i32_0 : i32, i32, i32
  }
  func.func @transform_1(%arg0: i32, %arg1: i32) -> (i32, i32) {
    %c0_i32 = arith.constant 0 : i32
    %c0_i32_0 = arith.constant 0 : i32
    %c0_i32_1 = arith.constant 0 : i32
    return %c0_i32, %c0_i32_0 : i32, i32
  }
  func.func @transform_2(%arg0: i32, %arg1: i32) -> (i32, i32) {
    %c0_i32 = arith.constant 0 : i32
    %c0_i32_0 = arith.constant 0 : i32
    %c0_i32_1 = arith.constant 0 : i32
    return %c0_i32, %c0_i32_0 : i32, i32
  }
  func.func @transform_3(%arg0: i32, %arg1: i32) -> (i32, i32) {
    %c0_i32 = arith.constant 0 : i32
    %c0_i32_0 = arith.constant 0 : i32
    %c0_i32_1 = arith.constant 0 : i32
    return %c0_i32, %c0_i32_0 : i32, i32
  }
  func.func @transform_4(%arg0: i32, %arg1: i32) -> (i32, i32) {
    %c0_i32 = arith.constant 0 : i32
    %c0_i32_0 = arith.constant 0 : i32
    %c0_i32_1 = arith.constant 0 : i32
    return %c0_i32, %c0_i32_0 : i32, i32
  }
  func.func @transform_5(%arg0: i32, %arg1: i32) -> (i32, i32) {
    %c0_i32 = arith.constant 0 : i32
    %c0_i32_0 = arith.constant 0 : i32
    %c0_i32_1 = arith.constant 0 : i32
    return %c0_i32, %c0_i32_0 : i32, i32
  }
  func.func @transform_6(%arg0: i32, %arg1: i32) -> (i32, i32, i32) {
    %c0_i32 = arith.constant 0 : i32
    %c0_i32_0 = arith.constant 0 : i32
    return %arg0, %arg1, %c0_i32 : i32, i32, i32
  }
}

</mosaic_0001>

<llo_original>
// kernel: tpu_custom_call.1
$region0: #{tpu_custom_call.1}
  #allocation0 [shape = 'u32[]', space=smem, size = 0x4, offset = 0x4, fixed_abs, tag = 'smem constant byte address 0x4 - core index']
  #allocation1 [shape = 'u32[72,128]{1,0:T(1,128)}', space=vmem, size = 0x9000, scoped, tag = 'internal scratch']
  %s0 = inlined_call_operand.hbm [shape: f32[2,8,32], index: 0, kind: input, shape index: {}]
  %s1 = inlined_call_operand.hbm [shape: f32[32,32], index: 1, kind: input, shape index: {}]
  %s2 = inlined_call_operand.hbm [shape: f32[32,64], index: 2, kind: input, shape index: {}]
  %s3 = inlined_call_operand.hbm [shape: f32[32,32], index: 3, kind: input, shape index: {}]
  %s4 = inlined_call_operand.vmem [shape: f32[1,32], index: 4, kind: input, shape index: {}]
  %s5 = inlined_call_operand.vmem [shape: f32[1,32], index: 5, kind: input, shape index: {}]
  %s6 = inlined_call_operand.hbm [shape: f32[2,8,32], index: 6, kind: output, shape index: {}]
  %s7 = sld [smem:[#allocation0]]
  $region73: #{tpu_custom_call.1} parent=0
    _
  %s9 = ssub.s32 1, %s7
  %s10 = scalar_select 0, %s9, %s7
  $region1: #{tpu_custom_call.1} parent=0
    #allocation2 [shape = 'u8[8192]{0}', space=vmem, size = 0x2000, scoped, tag = 'input window, operand 0']
    #allocation3 [shape = 's32[2]{0}', space=sflag, size = 0x8, scoped, tag = 'scoped memory for tpu_custom_call.1']
    #allocation4 [shape = 's32[2]{0}', space=sflag, size = 0x8, scoped, tag = 'scoped memory for tpu_custom_call.1']
    #allocation5 [shape = 'u8[16384]{0}', space=vmem, size = 0x4000, scoped, tag = 'input window, operand 1, single buffered']
    #allocation6 [shape = 's32[1]{0}', space=sflag, size = 0x4, scoped, tag = 'scoped memory for tpu_custom_call.1']
    #allocation7 [shape = 'u8[16384]{0}', space=vmem, size = 0x4000, scoped, tag = 'input window, operand 2, single buffered']
    #allocation8 [shape = 'u8[16384]{0}', space=vmem, size = 0x4000, scoped, tag = 'input window, operand 3, single buffered']
    #allocation9 [shape = 's32[1]{0}', space=sflag, size = 0x4, scoped, tag = 'scoped memory for tpu_custom_call.1']
    #allocation10 [shape = 'u8[8192]{0}', space=vmem, size = 0x2000, scoped, tag = 'output window, operand 0']
    %11 = vsyncpa [#allocation3], 0
    %s12 = scalar_lea.sflag [#allocation3], 1
    %13 = vsyncpa %s12, 0
    %14 = vsyncpa [#allocation6], 0
    %15 = vsyncpa [#allocation9], 0
    %16 = vsyncpa [#allocation4], 0
    %s17 = scalar_lea.sflag [#allocation4], 1
    %18 = vsyncpa %s17, 0
    loop: start=0, step=1, limit=4
    $region2: #{tpu_custom_call.1} parent=1 // loop_pre_header
      _
    $region3: #{tpu_custom_call.1} parent=1 // loop_header
      %s20 = sphi 0, %s24
      %p21 = scmp.ge.s32.totalorder %s20, 4
      %s27 = sphi 0, %s39
      %s28 = sphi 0, %s35
      %s29 = sphi 0, %s27
      %s30 = sphi 0, %s28
      %s31 = sphi 0, %s29
      %s32 = sphi 0, %s30
      %s42 = sphi 0, %s44
      %s45 = sphi 0, %s42
      %s46 = sphi 0, %s45
      %s62 = sphi 0, %s46
      %s66 = sphi 0, %s66
      %s68 = sphi 0, %s66
      %s69 = sphi 0, %s68
      %s83 = sphi 0, %s69
      %s87 = sphi 0, %s87
      %s89 = sphi 0, %s87
      %s90 = sphi 0, %s89
      %s104 = sphi 0, %s90
      %s108 = sphi 0, %s108
      %s110 = sphi 0, %s108
      %s111 = sphi 0, %s110
      %s125 = sphi 0, %s111
      %s129 = sphi 0, %s129
      %s131 = sphi 0, %s129
      %s132 = sphi 0, %s131
      %s146 = sphi 0, %s132
      %s150 = sphi 0, %s150
      %s152 = sphi 0, %s150
      %s153 = sphi 0, %s152
      %s167 = sphi 0, %s153
      %s175 = sphi 0, %s177
      %s178 = sphi 0, %s175
      %s179 = sphi 0, %s178
      %s195 = sphi 0, %s179
    $region4: #{tpu_custom_call.1} parent=1 // loop_header_branch
      %23 = sbr.rel (%p21) target = $region8
    $region5: #{tpu_custom_call.1} parent=1 // loop_body
      %s25 = ssub.s32 %s20, 1
      %s26 = ssub.s32 %s20, 2
      %s33 = sadd.s32 1, %s28
      %p34 = scmp.ge.s32.totalorder %s33, 1
      %s35 = scalar_select %p34, 0, %s33
      %s36 = sadd.s32 1, %s27
      %s37 = scalar_select %p34, %s36, %s27
      %p38 = scmp.ge.s32.totalorder %s37, 2
      %s39 = scalar_select %p38, 0, %s37
      %s40 = ssub.s32 %s27, %s39
      %p41 = scmp.eq.s32.totalorder %s40, 0
      %s43 = sadd.s32 %s42, 1
      %s44 = scalar_select %p41, %s42, %s43
      %p47 = pneg %p41
      %p48 = scmp.eq.s32.totalorder %s20, 1
      %p49 = por %p47, %p48
      %p50 = scmp.ne.s32.totalorder %s42, %s45
      %p51 = scmp.eq.s32.totalorder %s20, 0
      %p52 = por %p50, %p51
      %p53 = scmp.ne.s32.totalorder %s42, %s45
      %p54 = scmp.eq.s32.totalorder %s25, 1
      %p55 = por %p53, %p54
      %p56 = scmp.ne.s32.totalorder %s45, %s46
      %p57 = scmp.eq.s32.totalorder %s25, 0
      %p58 = por %p56, %p57
      %p59 = scmp.ne.s32.totalorder %s45, %s46
      %p60 = scmp.eq.s32.totalorder %s26, 1
      %p61 = por %p59, %p60
      %p63 = scmp.ne.s32.totalorder %s46, %s62
      %p64 = scmp.eq.s32.totalorder %s26, 0
      %p65 = por %p63, %p64
      %s67 = sadd.s32 %s66, 1
      %p70 = scmp.eq.s32.totalorder %s20, 1
      %p71 = scmp.ne.s32.totalorder %s66, %s68
      %p72 = scmp.eq.s32.totalorder %s20, 0
      %p73 = por %p71, %p72
      %p74 = scmp.ne.s32.totalorder %s66, %s68
      %p75 = scmp.eq.s32.totalorder %s25, 1
      %p76 = por %p74, %p75
      %p77 = scmp.ne.s32.totalorder %s68, %s69
      %p78 = scmp.eq.s32.totalorder %s25, 0
      %p79 = por %p77, %p78
      %p80 = scmp.ne.s32.totalorder %s68, %s69
      %p81 = scmp.eq.s32.totalorder %s26, 1
      %p82 = por %p80, %p81
      %p84 = scmp.ne.s32.totalorder %s69, %s83
      %p85 = scmp.eq.s32.totalorder %s26, 0
      %p86 = por %p84, %p85
      %s88 = sadd.s32 %s87, 1
      %p91 = scmp.eq.s32.totalorder %s20, 1
      %p92 = scmp.ne.s32.totalorder %s87, %s89
      %p93 = scmp.eq.s32.totalorder %s20, 0
      %p94 = por %p92, %p93
      %p95 = scmp.ne.s32.totalorder %s87, %s89
      %p96 = scmp.eq.s32.totalorder %s25, 1
      %p97 = por %p95, %p96
      %p98 = scmp.ne.s32.totalorder %s89, %s90
      %p99 = scmp.eq.s32.totalorder %s25, 0
      %p100 = por %p98, %p99
      %p101 = scmp.ne.s32.totalorder %s89, %s90
      %p102 = scmp.eq.s32.totalorder %s26, 1
      %p103 = por %p101, %p102
      %p105 = scmp.ne.s32.totalorder %s90, %s104
      %p106 = scmp.eq.s32.totalorder %s26, 0
      %p107 = por %p105, %p106
      %s109 = sadd.s32 %s108, 1
      %p112 = scmp.eq.s32.totalorder %s20, 1
      %p113 = scmp.ne.s32.totalorder %s108, %s110
      %p114 = scmp.eq.s32.totalorder %s20, 0
      %p115 = por %p113, %p114
      %p116 = scmp.ne.s32.totalorder %s108, %s110
      %p117 = scmp.eq.s32.totalorder %s25, 1
      %p118 = por %p116, %p117
      %p119 = scmp.ne.s32.totalorder %s110, %s111
      %p120 = scmp.eq.s32.totalorder %s25, 0
      %p121 = por %p119, %p120
      %p122 = scmp.ne.s32.totalorder %s110, %s111
      %p123 = scmp.eq.s32.totalorder %s26, 1
      %p124 = por %p122, %p123
      %p126 = scmp.ne.s32.totalorder %s111, %s125
      %p127 = scmp.eq.s32.totalorder %s26, 0
      %p128 = por %p126, %p127
      %s130 = sadd.s32 %s129, 1
      %p133 = scmp.eq.s32.totalorder %s20, 1
      %p134 = scmp.ne.s32.totalorder %s129, %s131
      %p135 = scmp.eq.s32.totalorder %s20, 0
      %p136 = por %p134, %p135
      %p137 = scmp.ne.s32.totalorder %s129, %s131
      %p138 = scmp.eq.s32.totalorder %s25, 1
      %p139 = por %p137, %p138
      %p140 = scmp.ne.s32.totalorder %s131, %s132
      %p141 = scmp.eq.s32.totalorder %s25, 0
      %p142 = por %p140, %p141
      %p143 = scmp.ne.s32.totalorder %s131, %s132
      %p144 = scmp.eq.s32.totalorder %s26, 1
      %p145 = por %p143, %p144
      %p147 = scmp.ne.s32.totalorder %s132, %s146
      %p148 = scmp.eq.s32.totalorder %s26, 0
      %p149 = por %p147, %p148
      %s151 = sadd.s32 %s150, 1
      %p154 = scmp.eq.s32.totalorder %s20, 1
      %p155 = scmp.ne.s32.totalorder %s150, %s152
      %p156 = scmp.eq.s32.totalorder %s20, 0
      %p157 = por %p155, %p156
      %p158 = scmp.ne.s32.totalorder %s150, %s152
      %p159 = scmp.eq.s32.totalorder %s25, 1
      %p160 = por %p158, %p159
      %p161 = scmp.ne.s32.totalorder %s152, %s153
      %p162 = scmp.eq.s32.totalorder %s25, 0
      %p163 = por %p161, %p162
      %p164 = scmp.ne.s32.totalorder %s152, %s153
      %p165 = scmp.eq.s32.totalorder %s26, 1
      %p166 = por %p164, %p165
      %p168 = scmp.ne.s32.totalorder %s153, %s167
      %p169 = scmp.eq.s32.totalorder %s26, 0
      %p170 = por %p168, %p169
      %s171 = ssub.s32 %s27, %s39
      %s172 = ssub.s32 %s28, %s35
      %s173 = sor.u32 %s171, %s172
      %p174 = scmp.eq.s32.totalorder %s173, 0
      %s176 = sadd.s32 %s175, 1
      %s177 = scalar_select %p174, %s175, %s176
      %p180 = pneg %p174
      %p181 = scmp.eq.s32.totalorder %s20, 1
      %p182 = por %p180, %p181
      %p183 = scmp.ne.s32.totalorder %s175, %s178
      %p184 = scmp.eq.s32.totalorder %s20, 0
      %p185 = por %p183, %p184
      %p186 = scmp.ne.s32.totalorder %s175, %s178
      %p187 = scmp.eq.s32.totalorder %s25, 1
      %p188 = por %p186, %p187
      %p189 = scmp.ne.s32.totalorder %s178, %s179
      %p190 = scmp.eq.s32.totalorder %s25, 0
      %p191 = por %p189, %p190
      %p192 = scmp.ne.s32.totalorder %s178, %s179
      %p193 = scmp.eq.s32.totalorder %s26, 1
      %p194 = por %p192, %p193
      %p196 = scmp.ne.s32.totalorder %s179, %s195
      %p197 = scmp.eq.s32.totalorder %s26, 0
      %p198 = por %p196, %p197
      %p199 = scmp.le.s32.totalorder 1, %s20
      %p200 = scmp.lt.s32.totalorder %s20, 3
      %p201 = pnand %p199, %p200
      %p202 = pneg %p201
      // Predicated region
      $region9: #{tpu_custom_call.1} parent=5 // pred_check
        _
      $region10: #{tpu_custom_call.1} parent=5 // pred_check_branch
        %204 = sbr.rel (%p201) target = $region12
      $region11: #{tpu_custom_call.1} parent=5 // pred_region
        %s205 = ssub.s32 %s20, 1
        // Predicated region
        $region13: #{tpu_custom_call.1} parent=11 // pred_check
          %p206 = pneg %p79
        $region14: #{tpu_custom_call.1} parent=11 // pred_check_branch
          %208 = sbr.rel (%p206) target = $region16
        $region15: #{tpu_custom_call.1} parent=11 // pred_region
          %210 = vsyncadd [#allocation6], 0
          %s211 = sshll.u32 %s1, 4
          %s212 = int_to_ptr.hbm [resolvable:$true] %s211
          %s213 = sshll.u32 [#allocation5], 4
          %s214 = int_to_ptr.vmem [resolvable:$true] %s213
          %219 = dma.hbm_to_vmem [thread:$0]  %s212, 512, %s214, [#allocation6], 128, 128, 8
        $region16: #{tpu_custom_call.1} parent=11 // pred_fallthru
          _
        // Predicated region
        $region17: #{tpu_custom_call.1} parent=11 // pred_check
          %p220 = pneg %p100
        $region18: #{tpu_custom_call.1} parent=11 // pred_check_branch
          %222 = sbr.rel (%p220) target = $region20
        $region19: #{tpu_custom_call.1} parent=11 // pred_region
          %224 = vsyncadd [#allocation6], 0
          %s225 = sshll.u32 %s2, 4
          %s226 = int_to_ptr.hbm [resolvable:$true] %s225
          %s227 = sshll.u32 [#allocation7], 4
          %s228 = int_to_ptr.vmem [resolvable:$true] %s227
          %233 = dma.hbm_to_vmem [thread:$0]  %s226, 512, %s228, [#allocation6], 128, 128, 8
        $region20: #{tpu_custom_call.1} parent=11 // pred_fallthru
          _
        // Predicated region
        $region21: #{tpu_custom_call.1} parent=11 // pred_check
          %p234 = pneg %p121
        $region22: #{tpu_custom_call.1} parent=11 // pred_check_branch
          %236 = sbr.rel (%p234) target = $region24
        $region23: #{tpu_custom_call.1} parent=11 // pred_region
          %238 = vsyncadd [#allocation9], 0
          %s239 = sshll.u32 %s3, 4
          %s240 = int_to_ptr.hbm [resolvable:$true] %s239
          %s241 = sshll.u32 [#allocation8], 4
          %s242 = int_to_ptr.vmem [resolvable:$true] %s241
          %247 = dma.hbm_to_vmem [thread:$0]  %s240, 512, %s242, [#allocation9], 128, 128, 8
        $region24: #{tpu_custom_call.1} parent=11 // pred_fallthru
          _
        // Predicated region
        $region25: #{tpu_custom_call.1} parent=11 // pred_check
          %p248 = pneg %p142
        $region26: #{tpu_custom_call.1} parent=11 // pred_check_branch
          %250 = sbr.rel (%p248) target = $region28
        $region27: #{tpu_custom_call.1} parent=11 // pred_region
          _
        $region28: #{tpu_custom_call.1} parent=11 // pred_fallthru
          _
        // Predicated region
        $region29: #{tpu_custom_call.1} parent=11 // pred_check
          %p251 = pneg %p163
        $region30: #{tpu_custom_call.1} parent=11 // pred_check_branch
          %253 = sbr.rel (%p251) target = $region32
        $region31: #{tpu_custom_call.1} parent=11 // pred_region
          _
        $region32: #{tpu_custom_call.1} parent=11 // pred_fallthru
          _
      $region12: #{tpu_custom_call.1} parent=5 // pred_fallthru
        _
      %p254 = scmp.lt.s32.totalorder %s20, 2
      // Predicated region
      $region33: #{tpu_custom_call.1} parent=5 // pred_check
        %p255 = pneg %p254
      $region34: #{tpu_custom_call.1} parent=5 // pred_check_branch
        %257 = sbr.rel (%p255) target = $region36
      $region35: #{tpu_custom_call.1} parent=5 // pred_region
        // Predicated region
        $region37: #{tpu_custom_call.1} parent=35 // pred_check
          %p258 = pneg %p52
        $region38: #{tpu_custom_call.1} parent=35 // pred_check_branch
          %260 = sbr.rel (%p258) target = $region40
        $region39: #{tpu_custom_call.1} parent=35 // pred_region
          %s261 = sand.u32 %s42, 1
          %s262 = scalar_lea.sflag [#allocation3], %s261
          %s263 = sand.u32 %s42, 1
          %s264 = smul.addr %s263, 8
          %s265 = scalar_lea.vmem [#allocation2], %s264
          %267 = vsyncadd %s262, 0
          %s268 = smul.addr %s27, 8
          %s269 = scalar_lea.hbm %s0, %s268
          %s271 = sshll.u32 %s269, 4
          %s272 = int_to_ptr.hbm [resolvable:$true] %s271
          %s273 = sshll.u32 %s265, 4
          %s274 = int_to_ptr.vmem [resolvable:$true] %s273
          %276 = dma.hbm_to_vmem [thread:$0]  %s272, 128, %s274, %s262
        $region40: #{tpu_custom_call.1} parent=35 // pred_fallthru
          _
      $region36: #{tpu_custom_call.1} parent=5 // pred_fallthru
        _
      %p277 = scmp.le.s32.totalorder 1, %s20
      %p278 = scmp.lt.s32.totalorder %s20, 3
      %p279 = pnand %p277, %p278
      %p280 = pneg %p279
      // Predicated region
      $region41: #{tpu_custom_call.1} parent=5 // pred_check
        _
      $region42: #{tpu_custom_call.1} parent=5 // pred_check_branch
        %282 = sbr.rel (%p279) target = $region44
      $region43: #{tpu_custom_call.1} parent=5 // pred_region
        %s283 = ssub.s32 %s20, 1
        %s284 = sand.u32 %s45, 1
        %s285 = scalar_lea.sflag [#allocation3], %s284
        %s286 = sand.u32 %s45, 1
        %s287 = smul.addr %s286, 8
        %s288 = scalar_lea.vmem [#allocation2], %s287
        // Predicated region
        $region45: #{tpu_custom_call.1} parent=43 // pred_check
          %p289 = pneg %p58
        $region46: #{tpu_custom_call.1} parent=43 // pred_check_branch
          %291 = sbr.rel (%p289) target = $region48
        $region47: #{tpu_custom_call.1} parent=43 // pred_region
          %293 = dma.done %s285, 128
        $region48: #{tpu_custom_call.1} parent=43 // pred_fallthru
          _
        // Predicated region
        $region49: #{tpu_custom_call.1} parent=43 // pred_check
          %p294 = pneg %p79
        $region50: #{tpu_custom_call.1} parent=43 // pred_check_branch
          %296 = sbr.rel (%p294) target = $region52
        $region51: #{tpu_custom_call.1} parent=43 // pred_region
          %298 = dma.done [#allocation6], 512
        $region52: #{tpu_custom_call.1} parent=43 // pred_fallthru
          _
        // Predicated region
        $region53: #{tpu_custom_call.1} parent=43 // pred_check
          %p299 = pneg %p100
        $region54: #{tpu_custom_call.1} parent=43 // pred_check_branch
          %301 = sbr.rel (%p299) target = $region56
        $region55: #{tpu_custom_call.1} parent=43 // pred_region
          %303 = dma.done [#allocation6], 512
        $region56: #{tpu_custom_call.1} parent=43 // pred_fallthru
          _
        // Predicated region
        $region57: #{tpu_custom_call.1} parent=43 // pred_check
          %p304 = pneg %p121
        $region58: #{tpu_custom_call.1} parent=43 // pred_check_branch
          %306 = sbr.rel (%p304) target = $region60
        $region59: #{tpu_custom_call.1} parent=43 // pred_region
          %308 = dma.done [#allocation9], 512
        $region60: #{tpu_custom_call.1} parent=43 // pred_fallthru
          _
        %s309 = sand.u32 %s45, 1
        %s310 = scalar_lea.sflag [#allocation3], %s309
        %s311 = sand.u32 %s45, 1
        %s312 = smul.addr %s311, 8
        %s313 = scalar_lea.vmem [#allocation2], %s312
        %p314 = pneg %p58
        %p315 = pneg %p55
        %p316 = pneg %p79
        %p317 = pneg %p76
        %p318 = pneg %p100
        %p319 = pneg %p97
        %p320 = pneg %p121
        %p321 = pneg %p118
        %p322 = pneg %p142
        %p323 = pneg %p139
        %p324 = pneg %p163
        %p325 = pneg %p160
        %p326 = pneg %p191
        %p327 = pneg %p188
        %s328 = sand.u32 %s178, 1
        %s329 = scalar_lea.sflag [#allocation4], %s328
        %s330 = sand.u32 %s178, 1
        %s331 = smul.addr %s330, 8
        %s332 = scalar_lea.vmem [#allocation10], %s331
        %s333 = smul.u32 %s30, 8
        %s334 = scalar_lea.vmem %s288, %s333 [#allocation2]
        %v335 = vld [vmem:[%s334] sm:$0xff]
        %v336 = vld [vmem:[%s288] sm:$0xff]
        %v337 = vld [vmem:[#allocation5] sm:$0xff]
        %v338 = vld [vmem:[#allocation5 + $0x8] sm:$0xff]
        %v339 = vld [vmem:[#allocation5 + $0x10] sm:$0xff]
        %v340 = vld [vmem:[#allocation5 + $0x18] sm:$0xff]
        %v341 = vld [vmem:[#allocation7] sm:$0xff]
        %v342 = vld [vmem:[#allocation7 + $0x8] sm:$0xff]
        %v343 = vld [vmem:[#allocation7 + $0x10] sm:$0xff]
        %v344 = vld [vmem:[#allocation7 + $0x18] sm:$0xff]
        %v345 = vld [vmem:[#allocation8] sm:$0xff]
        %v346 = vld [vmem:[#allocation8 + $0x8] sm:$0xff]
        %v347 = vld [vmem:[#allocation8 + $0x10] sm:$0xff]
        %v348 = vld [vmem:[#allocation8 + $0x18] sm:$0xff]
        %v349 = vld [vmem:[%s4] sm:$0x1]
        %v350 = vld [vmem:[%s5] sm:$0x1]
        %vm351 = vcmask 261120
        %v353 = vsel %vm351, %v335, 0
        %355 = vmatpush.msra.mxu0 0.0
        %356 = vmatpush.msra.mxu0 0.0
        %357 = vmatpush.msra.mxu0 0.0
        %358 = vmatpush.msra.mxu0 0.0
        %359 = vmatpush.msra.mxu0 0.0
        %360 = vmatpush.msra.mxu0 0.0
        %361 = vmatpush.msra.mxu0 0.0
        %362 = vmatpush.msra.mxu0 0.0
        %363 = vmatpush.msra.mxu0 0.0
        %364 = vmatpush.msra.mxu0 0.0
        %365 = vmatpush.msra.mxu0 0.0
        %366 = vmatpush.msra.mxu0 0.0
        %367 = vmatpush.msra.mxu0 %v340
        %368 = vmatpush.msra.mxu0 %v339
        %369 = vmatpush.msra.mxu0 %v338
        %370 = vmatpush.msra.mxu0 %v337
        %371 = vmatmul.f32.gmra.mxu0 %v353
        %v372 = vpop.f32.mrf.mxu0
        %v373 = vadd.f32 0.0, %v372
        %374 = vdwg.mxu0
        %v376 = vsel %vm351, %v336, 0
        %378 = vmatpush.msra.mxu0 0.0
        %379 = vmatpush.msra.mxu0 0.0
        %380 = vmatpush.msra.mxu0 0.0
        %381 = vmatpush.msra.mxu0 0.0
        %382 = vmatpush.msra.mxu0 0.0
        %383 = vmatpush.msra.mxu0 0.0
        %384 = vmatpush.msra.mxu0 0.0
        %385 = vmatpush.msra.mxu0 0.0
        %386 = vmatpush.msra.mxu0 0.0
        %387 = vmatpush.msra.mxu0 0.0
        %388 = vmatpush.msra.mxu0 0.0
        %389 = vmatpush.msra.mxu0 0.0
        %390 = vmatpush.msra.mxu0 %v344
        %391 = vmatpush.msra.mxu0 %v343
        %392 = vmatpush.msra.mxu0 %v342
        %393 = vmatpush.msra.mxu0 %v341
        %394 = vmatmul.f32.gmra.mxu0 %v376
        %v395 = vpop.f32.mrf.mxu0
        %v396 = vadd.f32 0.0, %v395
        %397 = vdwg.mxu0
        %vm398 = vcmask 64512
        %v400 = vsel %vm398, %v373, 0
        %v403 = vsel %vm398, %v396, 0
        %405 = vmatpush.xpose.msra.mxu0 0.0
        %406 = vmatpush.xpose.msra.mxu0 0.0
        %407 = vmatpush.xpose.msra.mxu0 0.0
        %408 = vmatpush.xpose.msra.mxu0 0.0
        %409 = vmatpush.xpose.msra.mxu0 0.0
        %410 = vmatpush.xpose.msra.mxu0 0.0
        %411 = vmatpush.xpose.msra.mxu0 0.0
        %412 = vmatpush.xpose.msra.mxu0 0.0
        %413 = vmatpush.xpose.msra.mxu0 0.0
        %414 = vmatpush.xpose.msra.mxu0 0.0
        %415 = vmatpush.xpose.msra.mxu0 0.0
        %416 = vmatpush.xpose.msra.mxu0 0.0
        %417 = vmatpush.xpose.msra.mxu0 0.0
        %418 = vmatpush.xpose.msra.mxu0 0.0
        %419 = vmatpush.xpose.msra.mxu0 0.0
        %420 = vmatpush.xpose.msra.mxu0 %v403
        %421 = vmatmul.f32.gmra.mxu0 %v400
        %v422 = vpop.f32.mrf.mxu0
        %v423 = vadd.f32 0.0, %v422
        %424 = vdwg.mxu0
        %v425 = vsel %vm398, %v423, -inf
        %426 = vmax.xlane.f32.xlu0 %v425
        %v427 = vpop.xlane.xlu0 %426
        %v428 = vsub.f32 %v423, %v427
        %v429 = vmul.f32 %v428, 1.442695
        %v430 = vpow.pop %v429
        %v431 = vsel %vm398, %v430, 0.0
        %432 = vadd.xlane.f32.xlu0 %v431
        %v433 = vpop.xlane.xlu0 %432
        %v434 = vrcp.pop %v433
        %v435 = vmul.f32 %v433, %v434
        %v436 = vsub.f32 1.0, %v435
        %v437 = vmul.f32 %v434, %v436
        %v438 = vadd.f32 %v434, %v437
        %vm439 = vweird.f32 %v433
        %vm440 = vweird.f32 %v434
        %vm441 = vmor %vm439, %vm440
        %v442 = vsel %vm441, %v434, %v438
        %v443 = vand.u32 2147483647, %v433
        %vm444 = vcmp.eq.f32.partialorder %v443, 8.507059e+37
        %v445 = vand.u32 %v433, 2147483648
        %v446 = vor.u32 1.1754944e-38, %v445
        %v447 = vsel %vm444, %v446, %v442
        %v448 = vmul.f32 %v430, %v447
        %449 = vrot.lane.b32.xlu0 %v396, 96
        %v450 = vpop.permute.xlu0 %449
        %v453 = vsel %vm398, %v448, 0
        %455 = vmatpush.msra.mxu0 0.0
        %456 = vmatpush.msra.mxu0 0.0
        %457 = vmatpush.msra.mxu0 0.0
        %458 = vmatpush.msra.mxu0 0.0
        %459 = vmatpush.msra.mxu0 0.0
        %460 = vmatpush.msra.mxu0 0.0
        %461 = vmatpush.msra.mxu0 0.0
        %462 = vmatpush.msra.mxu0 0.0
        %463 = vmatpush.msra.mxu0 0.0
        %464 = vmatpush.msra.mxu0 0.0
        %465 = vmatpush.msra.mxu0 0.0
        %466 = vmatpush.msra.mxu0 0.0
        %467 = vmatpush.msra.mxu0 0.0
        %468 = vmatpush.msra.mxu0 0.0
        %469 = vmatpush.msra.mxu0 0.0
        %470 = vmatpush.msra.mxu0 %v450
        %471 = vmatmul.f32.gmra.mxu0 %v453
        %v472 = vpop.f32.mrf.mxu0
        %v473 = vadd.f32 0.0, %v472
        %474 = vdwg.mxu0
        %475 = vrot.lane.b32.xlu0 %v373, 120
        %v476 = vpop.permute.xlu0 %475
        %477 = vrot.lane.b32.xlu0 %v396, 120
        %v478 = vpop.permute.xlu0 %477
        %v479 = vsel %vm398, %v476, 0
        %v481 = vsel %vm398, %v478, 0
        %483 = vmatpush.xpose.msra.mxu0 0.0
        %484 = vmatpush.xpose.msra.mxu0 0.0
        %485 = vmatpush.xpose.msra.mxu0 0.0
        %486 = vmatpush.xpose.msra.mxu0 0.0
        %487 = vmatpush.xpose.msra.mxu0 0.0
        %488 = vmatpush.xpose.msra.mxu0 0.0
        %489 = vmatpush.xpose.msra.mxu0 0.0
        %490 = vmatpush.xpose.msra.mxu0 0.0
        %491 = vmatpush.xpose.msra.mxu0 0.0
        %492 = vmatpush.xpose.msra.mxu0 0.0
        %493 = vmatpush.xpose.msra.mxu0 0.0
        %494 = vmatpush.xpose.msra.mxu0 0.0
        %495 = vmatpush.xpose.msra.mxu0 0.0
        %496 = vmatpush.xpose.msra.mxu0 0.0
        %497 = vmatpush.xpose.msra.mxu0 0.0
        %498 = vmatpush.xpose.msra.mxu0 %v481
        %499 = vmatmul.f32.gmra.mxu0 %v479
        %v500 = vpop.f32.mrf.mxu0
        %v501 = vadd.f32 0.0, %v500
        %502 = vdwg.mxu0
        %v503 = vsel %vm398, %v501, -inf
        %504 = vmax.xlane.f32.xlu0 %v503
        %v505 = vpop.xlane.xlu0 %504
        %v506 = vsub.f32 %v501, %v505
        %v507 = vmul.f32 %v506, 1.442695
        %v508 = vpow.pop %v507
        %v509 = vsel %vm398, %v508, 0.0
        %510 = vadd.xlane.f32.xlu0 %v509
        %v511 = vpop.xlane.xlu0 %510
        %v512 = vrcp.pop %v511
        %v513 = vmul.f32 %v511, %v512
        %v514 = vsub.f32 1.0, %v513
        %v515 = vmul.f32 %v512, %v514
        %v516 = vadd.f32 %v512, %v515
        %vm517 = vweird.f32 %v511
        %vm518 = vweird.f32 %v512
        %vm519 = vmor %vm517, %vm518
        %v520 = vsel %vm519, %v512, %v516
        %v521 = vand.u32 2147483647, %v511
        %vm522 = vcmp.eq.f32.partialorder %v521, 8.507059e+37
        %v523 = vand.u32 %v511, 2147483648
        %v524 = vor.u32 1.1754944e-38, %v523
        %v525 = vsel %vm522, %v524, %v520
        %v526 = vmul.f32 %v508, %v525
        %527 = vrot.lane.b32.xlu0 %v396, 88
        %v528 = vpop.permute.xlu0 %527
        %v531 = vsel %vm398, %v526, 0
        %533 = vmatpush.msra.mxu0 0.0
        %534 = vmatpush.msra.mxu0 0.0
        %535 = vmatpush.msra.mxu0 0.0
        %536 = vmatpush.msra.mxu0 0.0
        %537 = vmatpush.msra.mxu0 0.0
        %538 = vmatpush.msra.mxu0 0.0
        %539 = vmatpush.msra.mxu0 0.0
        %540 = vmatpush.msra.mxu0 0.0
        %541 = vmatpush.msra.mxu0 0.0
        %542 = vmatpush.msra.mxu0 0.0
        %543 = vmatpush.msra.mxu0 0.0
        %544 = vmatpush.msra.mxu0 0.0
        %545 = vmatpush.msra.mxu0 0.0
        %546 = vmatpush.msra.mxu0 0.0
        %547 = vmatpush.msra.mxu0 0.0
        %548 = vmatpush.msra.mxu0 %v528
        %549 = vmatmul.f32.gmra.mxu0 %v531
        %v550 = vpop.f32.mrf.mxu0
        %v551 = vadd.f32 0.0, %v550
        %552 = vdwg.mxu0
        %553 = vrot.lane.b32.xlu0 %v373, 112
        %v554 = vpop.permute.xlu0 %553
        %555 = vrot.lane.b32.xlu0 %v396, 112
        %v556 = vpop.permute.xlu0 %555
        %v557 = vsel %vm398, %v554, 0
        %v559 = vsel %vm398, %v556, 0
        %561 = vmatpush.xpose.msra.mxu0 0.0
        %562 = vmatpush.xpose.msra.mxu0 0.0
        %563 = vmatpush.xpose.msra.mxu0 0.0
        %564 = vmatpush.xpose.msra.mxu0 0.0
        %565 = vmatpush.xpose.msra.mxu0 0.0
        %566 = vmatpush.xpose.msra.mxu0 0.0
        %567 = vmatpush.xpose.msra.mxu0 0.0
        %568 = vmatpush.xpose.msra.mxu0 0.0
        %569 = vmatpush.xpose.msra.mxu0 0.0
        %570 = vmatpush.xpose.msra.mxu0 0.0
        %571 = vmatpush.xpose.msra.mxu0 0.0
        %572 = vmatpush.xpose.msra.mxu0 0.0
        %573 = vmatpush.xpose.msra.mxu0 0.0
        %574 = vmatpush.xpose.msra.mxu0 0.0
        %575 = vmatpush.xpose.msra.mxu0 0.0
        %576 = vmatpush.xpose.msra.mxu0 %v559
        %577 = vmatmul.f32.gmra.mxu0 %v557
        %v578 = vpop.f32.mrf.mxu0
        %v579 = vadd.f32 0.0, %v578
        %580 = vdwg.mxu0
        %v581 = vsel %vm398, %v579, -inf
        %582 = vmax.xlane.f32.xlu0 %v581
        %v583 = vpop.xlane.xlu0 %582
        %v584 = vsub.f32 %v579, %v583
        %v585 = vmul.f32 %v584, 1.442695
        %v586 = vpow.pop %v585
        %v587 = vsel %vm398, %v586, 0.0
        %588 = vadd.xlane.f32.xlu0 %v587
        %v589 = vpop.xlane.xlu0 %588
        %v590 = vrcp.pop %v589
        %v591 = vmul.f32 %v589, %v590
        %v592 = vsub.f32 1.0, %v591
        %v593 = vmul.f32 %v590, %v592
        %v594 = vadd.f32 %v590, %v593
        %vm595 = vweird.f32 %v589
        %vm596 = vweird.f32 %v590
        %vm597 = vmor %vm595, %vm596
        %v598 = vsel %vm597, %v590, %v594
        %v599 = vand.u32 2147483647, %v589
        %vm600 = vcmp.eq.f32.partialorder %v599, 8.507059e+37
        %v601 = vand.u32 %v589, 2147483648
        %v602 = vor.u32 1.1754944e-38, %v601
        %v603 = vsel %vm600, %v602, %v598
        %v604 = vmul.f32 %v586, %v603
        %605 = vrot.lane.b32.xlu0 %v396, 80
        %v606 = vpop.permute.xlu0 %605
        %v609 = vsel %vm398, %v604, 0
        %611 = vmatpush.msra.mxu0 0.0
        %612 = vmatpush.msra.mxu0 0.0
        %613 = vmatpush.msra.mxu0 0.0
        %614 = vmatpush.msra.mxu0 0.0
        %615 = vmatpush.msra.mxu0 0.0
        %616 = vmatpush.msra.mxu0 0.0
        %617 = vmatpush.msra.mxu0 0.0
        %618 = vmatpush.msra.mxu0 0.0
        %619 = vmatpush.msra.mxu0 0.0
        %620 = vmatpush.msra.mxu0 0.0
        %621 = vmatpush.msra.mxu0 0.0
        %622 = vmatpush.msra.mxu0 0.0
        %623 = vmatpush.msra.mxu0 0.0
        %624 = vmatpush.msra.mxu0 0.0
        %625 = vmatpush.msra.mxu0 0.0
        %626 = vmatpush.msra.mxu0 %v606
        %627 = vmatmul.f32.gmra.mxu0 %v609
        %v628 = vpop.f32.mrf.mxu0
        %v629 = vadd.f32 0.0, %v628
        %630 = vdwg.mxu0
        %631 = vrot.lane.b32.xlu0 %v373, 104
        %v632 = vpop.permute.xlu0 %631
        %633 = vrot.lane.b32.xlu0 %v396, 104
        %v634 = vpop.permute.xlu0 %633
        %v635 = vsel %vm398, %v632, 0
        %v637 = vsel %vm398, %v634, 0
        %639 = vmatpush.xpose.msra.mxu0 0.0
        %640 = vmatpush.xpose.msra.mxu0 0.0
        %641 = vmatpush.xpose.msra.mxu0 0.0
        %642 = vmatpush.xpose.msra.mxu0 0.0
        %643 = vmatpush.xpose.msra.mxu0 0.0
        %644 = vmatpush.xpose.msra.mxu0 0.0
        %645 = vmatpush.xpose.msra.mxu0 0.0
        %646 = vmatpush.xpose.msra.mxu0 0.0
        %647 = vmatpush.xpose.msra.mxu0 0.0
        %648 = vmatpush.xpose.msra.mxu0 0.0
        %649 = vmatpush.xpose.msra.mxu0 0.0
        %650 = vmatpush.xpose.msra.mxu0 0.0
        %651 = vmatpush.xpose.msra.mxu0 0.0
        %652 = vmatpush.xpose.msra.mxu0 0.0
        %653 = vmatpush.xpose.msra.mxu0 0.0
        %654 = vmatpush.xpose.msra.mxu0 %v637
        %655 = vmatmul.f32.gmra.mxu0 %v635
        %v656 = vpop.f32.mrf.mxu0
        %v657 = vadd.f32 0.0, %v656
        %658 = vdwg.mxu0
        %v659 = vsel %vm398, %v657, -inf
        %660 = vmax.xlane.f32.xlu0 %v659
        %v661 = vpop.xlane.xlu0 %660
        %v662 = vsub.f32 %v657, %v661
        %v663 = vmul.f32 %v662, 1.442695
        %v664 = vpow.pop %v663
        %v665 = vsel %vm398, %v664, 0.0
        %666 = vadd.xlane.f32.xlu0 %v665
        %v667 = vpop.xlane.xlu0 %666
        %v668 = vrcp.pop %v667
        %v669 = vmul.f32 %v667, %v668
        %v670 = vsub.f32 1.0, %v669
        %v671 = vmul.f32 %v668, %v670
        %v672 = vadd.f32 %v668, %v671
        %vm673 = vweird.f32 %v667
        %vm674 = vweird.f32 %v668
        %vm675 = vmor %vm673, %vm674
        %v676 = vsel %vm675, %v668, %v672
        %v677 = vand.u32 2147483647, %v667
        %vm678 = vcmp.eq.f32.partialorder %v677, 8.507059e+37
        %v679 = vand.u32 %v667, 2147483648
        %v680 = vor.u32 1.1754944e-38, %v679
        %v681 = vsel %vm678, %v680, %v676
        %v682 = vmul.f32 %v664, %v681
        %683 = vrot.lane.b32.xlu0 %v396, 72
        %v684 = vpop.permute.xlu0 %683
        %v687 = vsel %vm398, %v682, 0
        %689 = vmatpush.msra.mxu0 0.0
        %690 = vmatpush.msra.mxu0 0.0
        %691 = vmatpush.msra.mxu0 0.0
        %692 = vmatpush.msra.mxu0 0.0
        %693 = vmatpush.msra.mxu0 0.0
        %694 = vmatpush.msra.mxu0 0.0
        %695 = vmatpush.msra.mxu0 0.0
        %696 = vmatpush.msra.mxu0 0.0
        %697 = vmatpush.msra.mxu0 0.0
        %698 = vmatpush.msra.mxu0 0.0
        %699 = vmatpush.msra.mxu0 0.0
        %700 = vmatpush.msra.mxu0 0.0
        %701 = vmatpush.msra.mxu0 0.0
        %702 = vmatpush.msra.mxu0 0.0
        %703 = vmatpush.msra.mxu0 0.0
        %704 = vmatpush.msra.mxu0 %v684
        %705 = vmatmul.f32.gmra.mxu0 %v687
        %v706 = vpop.f32.mrf.mxu0
        %v707 = vadd.f32 0.0, %v706
        %708 = vdwg.mxu0
        %710 = vrot.lane.b32.xlu0 %v551, 8
        %v711 = vpop.permute.xlu0 %710
        %714 = vrot.lane.b32.xlu0 %v629, 16
        %v715 = vpop.permute.xlu0 %714
        %718 = vrot.lane.b32.xlu0 %v707, 24
        %v719 = vpop.permute.xlu0 %718
        %v721 = vsel %vm398, %v473, %v711
        %vm722 = vcmask 130048
        %v723 = vsel %vm722, %v721, %v715
        %vm724 = vcmask 195584
        %v725 = vsel %vm724, %v723, %v719
        %v727 = vsel %vm351, %v725, 0
        %729 = vmatpush.msra.mxu0 0.0
        %730 = vmatpush.msra.mxu0 0.0
        %731 = vmatpush.msra.mxu0 0.0
        %732 = vmatpush.msra.mxu0 0.0
        %733 = vmatpush.msra.mxu0 0.0
        %734 = vmatpush.msra.mxu0 0.0
        %735 = vmatpush.msra.mxu0 0.0
        %736 = vmatpush.msra.mxu0 0.0
        %737 = vmatpush.msra.mxu0 0.0
        %738 = vmatpush.msra.mxu0 0.0
        %739 = vmatpush.msra.mxu0 0.0
        %740 = vmatpush.msra.mxu0 0.0
        %741 = vmatpush.msra.mxu0 %v348
        %742 = vmatpush.msra.mxu0 %v347
        %743 = vmatpush.msra.mxu0 %v346
        %744 = vmatpush.msra.mxu0 %v345
        %745 = vmatmul.f32.gmra.mxu0 %v727
        %v746 = vpop.f32.mrf.mxu0
        %v747 = vadd.f32 0.0, %v746
        %748 = vdwg.mxu0
        %v749 = vadd.f32 %v335, %v747
        %v750 = vsel %vm351, %v749, 0.0
        %751 = vadd.xlane.f32.xlu0 %v750
        %v752 = vpop.xlane.xlu0 %751
        %v753 = vrcp.pop 32.0
        %v754 = vmul.f32 32.0, %v753
        %v755 = vsub.f32 1.0, %v754
        %v756 = vmul.f32 %v753, %v755
        %v757 = vadd.f32 %v753, %v756
        %vm758 = vweird.f32 %v753
        %v759 = vsel %vm758, %v753, %v757
        %v760 = vmul.f32 %v752, %v759
        %v761 = vsub.f32 %v749, %v760
        %v762 = vmul.f32 %v761, %v761
        %v763 = vsel %vm351, %v762, 0.0
        %764 = vadd.xlane.f32.xlu0 %v763
        %v765 = vpop.xlane.xlu0 %764
        %v766 = vmul.f32 %v765, %v759
        %v767 = vadd.f32 %v766, 1e-05
        %v768 = vrsqrt.pop %v767
        %v769 = vmul.f32 %v768, %v767
        %v770 = vmul.f32 %v769, %v768
        %v771 = vmul.f32 0.5, %v770
        %v772 = vsub.f32 1.5, %v771
        %v773 = vmul.f32 %v768, %v772
        %vm774 = vweird.f32 %v767
        %vm775 = vweird.f32 %v768
        %vm776 = vmor %vm774, %vm775
        %v777 = vsel %vm776, %v768, %v773
        %v778 = vmul.f32 %v761, %v777
        %v780 = vperm.slane %v349, 0
        %v782 = vmul.f32 %v778, %v780
        %v784 = vperm.slane %v350, 0
        %v786 = vadd.f32 %v782, %v784
        %787 = vst.msk [vmem:[%s332] sm:$0xff] %vm351, %v786
        %s788 = sand.u32 %s178, 1
        %s789 = scalar_lea.sflag [#allocation4], %s788
        %s790 = sand.u32 %s178, 1
        %s791 = smul.addr %s790, 8
        %s792 = scalar_lea.vmem [#allocation10], %s791
        // Predicated region
        $region61: #{tpu_custom_call.1} parent=43 // pred_check
          %p793 = pneg %p188
        $region62: #{tpu_custom_call.1} parent=43 // pred_check_branch
          %795 = sbr.rel (%p793) target = $region64
        $region63: #{tpu_custom_call.1} parent=43 // pred_region
          %797 = vsyncadd %s789, 0
          %s798 = sadd.s32 %s30, %s29
          %s799 = smul.addr %s798, 8
          %s800 = scalar_lea.hbm %s6, %s799
          %s802 = sshll.u32 %s792, 4
          %s803 = int_to_ptr.vmem [resolvable:$true] %s802
          %s804 = sshll.u32 %s800, 4
          %s805 = int_to_ptr.hbm [resolvable:$true] %s804
          %807 = dma.vmem_to_hbm [thread:$0]  %s803, 128, %s805, %s789
        $region64: #{tpu_custom_call.1} parent=43 // pred_fallthru
          _
      $region44: #{tpu_custom_call.1} parent=5 // pred_fallthru
        _
      %p808 = scmp.le.s32.totalorder 2, %s20
      // Predicated region
      $region65: #{tpu_custom_call.1} parent=5 // pred_check
        %p809 = pneg %p808
      $region66: #{tpu_custom_call.1} parent=5 // pred_check_branch
        %811 = sbr.rel (%p809) target = $region68
      $region67: #{tpu_custom_call.1} parent=5 // pred_region
        %s812 = ssub.s32 %s20, 2
        // Predicated region
        $region69: #{tpu_custom_call.1} parent=67 // pred_check
          %p813 = pneg %p194
        $region70: #{tpu_custom_call.1} parent=67 // pred_check_branch
          %815 = sbr.rel (%p813) target = $region72
        $region71: #{tpu_custom_call.1} parent=67 // pred_region
          %s816 = sand.u32 %s179, 1
          %s817 = scalar_lea.sflag [#allocation4], %s816
          %s818 = sand.u32 %s179, 1
          %s819 = smul.addr %s818, 8
          %s820 = scalar_lea.vmem [#allocation10], %s819
          %822 = dma.done %s817, 128
        $region72: #{tpu_custom_call.1} parent=67 // pred_fallthru
          _
      $region68: #{tpu_custom_call.1} parent=5 // pred_fallthru
        _
    $region6: #{tpu_custom_call.1} parent=1 // loop_footer
      %s24 = sadd.s32 1, %s20
    $region7: #{tpu_custom_call.1} parent=1 // loop_footer_branch
      %19 = sbr.rel target = $region3
    $region8: #{tpu_custom_call.1} parent=1 // loop_exit
      _
    %823 = vsyncpa [#allocation3], 1
    %s824 = scalar_lea.sflag [#allocation3], 1
    %825 = vsyncpa %s824, 1
    %826 = vsyncpa [#allocation6], 1
    %827 = vsyncpa [#allocation9], 1
    %828 = vsyncpa [#allocation4], 1
    %s829 = scalar_lea.sflag [#allocation4], 1
    %830 = vsyncpa %s829, 1

</llo_original>
